<compile_context>
chip_gen: v6e
topology: v6e:2x2x1
jax: 0.10.0
libtpu: 0.0.40
codegen_flags: <defaults>
</compile_context>

<pallas_src>
import functools

import jax
import jax.numpy as jnp
import numpy as np
from jax.experimental import pallas as pl
from jax.experimental.pallas import tpu as pltpu


# ----------------------------------------------------------------------------
# Kernel
# ----------------------------------------------------------------------------
def _cnndst_kernel(x_ref, out_ref, *, n_bits):
    """Fused CNNDSTv2 forward for one batch tile (rows are independent).

    x_ref:   (bb, 2*L) f32 - per row: [channel-0 lanes | channel-1 lanes]
             (the native row-major layout of (bb, 2, L)).
    out_ref: (bb, L)  f32 - Moebius( zeta(ch0) * zeta(ch1) ).
    L = 2**n_bits lives on the lane axis.
    """
    L = 1 << n_bits
    x = x_ref[...]
    q0 = x[:, :L]
    q1 = x[:, L:]

    # (1, L) keep-masks, computed once and shared by both trees.
    lane = jax.lax.broadcasted_iota(jnp.int32, (1, L), 1)
    masks = [(lane & (1 << k)) == 0 for k in range(n_bits)]

    def partner(arr, step):
        # partner[:, i] = arr[:, i + step] on every lane that consumes it
        # (lanes with bit k == 0); the wrapped head is masked out because those
        # lanes have bit k set.  For step >= 128 both slice boundaries are
        # lane-tile aligned (plain offset reads, no cross-lane rotate).
        return jnp.concatenate([arr[:, step:], arr[:, :step]], axis=-1)

    # --- h_2 tree: N grouped Conv1d(2,2,k=2,s=2) layers with weights
    # (1,1)/(0,1) baked in == superset-sum (zeta) butterfly on both channels.
    # The '1' branch is "keep the element", so no second stream is ever stored.
    for k in range(n_bits):
        step = 1 << k
        m = masks[k]
        q0 = q0 + jnp.where(m, partner(q0, step), 0.0)
        q1 = q1 + jnp.where(m, partner(q1, step), 0.0)

    # --- per-tag product of the two conv groups.
    v = q0 * q1

    # --- subtraction tree: Conv1d(1,1,k=2,s=2) layers with weights
    # (1,-1)/(0,1) baked in == Moebius inversion of the same transform.
    for k in range(n_bits):
        step = 1 << k
        v = v - jnp.where(masks[k], partner(v, step), 0.0)

    out_ref[...] = v


# ----------------------------------------------------------------------------
# Batch blocking / wrapper
# ----------------------------------------------------------------------------
def _round_up(x: int, m: int) -> int:
    return ((x + m - 1) // m) * m


def _pick_batch_block(batch: int, L: int) -> int:
    """VMEM- and L-aware batch tile (multiple of 8)."""
    # ~10 live (row x L) f32 buffers per grid step: input (2L) + output (L),
    # double-buffered by the pipeline, plus in-kernel temporaries.  24 MiB of
    # working set leaves headroom inside the 48 MiB scoped budget below and
    # fits v7x's 64 MiB physical VMEM.
    vmem_budget = 24 * 1024 * 1024
    per_row_bytes = 10 * 4 * L
    bb = vmem_budget // per_row_bytes
    bb = max(8, min(512, (bb // 8) * 8))
    # never larger than the (sublane-rounded) batch itself
    bb = min(bb, _round_up(batch, 8))
    # keep >= ~4 grid steps when the batch allows it: megacore split on v7x's
    # two TensorCores and DMA/compute overlap on single-TC chips.
    if batch > 8:
        bb = min(bb, max(8, _round_up((batch + 3) // 4, 8)))
    return int(bb)


@jax.jit
def _forward_rows(M):
    """Row-wise zeta -> channel product -> Moebius.  M: (B, 2, L) -> (B, L)."""
    B, C, L = M.shape
    if C != 2:
        raise ValueError(f"expected 2 channels, got {C}")
    n_bits = int(L).bit_length() - 1
    if L != (1 << n_bits):
        raise ValueError(f"spatial length must be a power of two, got {L}")
    M = M.astype(jnp.float32)

    bb = _pick_batch_block(B, L)
    B_pad = _round_up(B, bb)
    if B_pad != B:
        # robust handling of awkward (prime / non-multiple-of-8) batch sizes
        M = jnp.concatenate([M, jnp.zeros((B_pad - B, 2, L), M.dtype)], axis=0)

    # Free row-major reshape: per row, channel 0's L lanes then channel 1's.
    x2 = M.reshape(B_pad, 2 * L)
    grid = (B_pad // bb,)

    out = pl.pallas_call(
        functools.partial(_cnndst_kernel, n_bits=n_bits),
        out_shape=jax.ShapeDtypeStruct((B_pad, L), jnp.float32),
        grid=grid,
        in_specs=[pl.BlockSpec((bb, 2 * L), lambda i: (i, 0))],
        out_specs=pl.BlockSpec((bb, L), lambda i: (i, 0)),
        compiler_params=pltpu.CompilerParams(
            dimension_semantics=("parallel",),       # batch tiles independent
            vmem_limit_bytes=48 * 1024 * 1024,       # fits v7x (64 MiB) w/ headroom
        ),
        cost_estimate=pl.CostEstimate(
            flops=(6 * n_bits + 1) * B_pad * L,
            transcendentals=0,
            bytes_accessed=3 * B_pad * L * 4,
        ),
    )(x2)
    return out[:B]


class CNNDSTv2Batch:
    """Pallas-TPU port of CNNDSTv2_batch (h_2_module_batch + subtraction_module_batch)."""

    def __init__(self, N: int):
        self.N = N
        self.len = 2 ** N

    def _check(self, M):
        M = jnp.asarray(M, jnp.float32)
        if M.ndim != 3 or M.shape[1] != 2 or M.shape[2] != self.len:
            raise ValueError(
                f"expected input of shape (batch, 2, {self.len}), got {M.shape}")
        return M

    def forward(self, M):
        # Faithful to the PyTorch module: its `g0[idx:idx+1]` slicing after the
        # first conv keeps only batch row 0, so the output is always
        # (1, 2**N, 1, 1) computed from M[0].
        M = self._check(M)
        row = _forward_rows(M[0:1])                       # (1, L)
        return row.reshape(1, self.len, 1, 1)

    __call__ = forward

    def forward_all_rows(self, M):
        # Per-row batched variant (every row processed independently);
        # returns (batch, 2**N, 1, 1).
        M = self._check(M)
        out = _forward_rows(M)                            # (B, L)
        return out.reshape(M.shape[0], self.len, 1, 1)

    def post_process_m(self, m):
        return m.reshape(m.shape[:2])


# ----------------------------------------------------------------------------
# References for the self-test
# ----------------------------------------------------------------------------
def _reference_forward(M, N):
    """Literal jnp port of CNNDSTv2_batch.forward (tag strings, sorting, and
    the `[idx:idx+1]` slicing that keeps only batch row 0)."""
    def h2_step(x):   # grouped Conv1d(2,2,k=2,s=2), weights (1,1)/(0,1)
        even = x[:, :, 0::2]
        odd = x[:, :, 1::2]
        return even + odd, odd

    def sub_step(x):  # Conv1d(1,1,k=2,s=2), weights (1,-1)/(0,1)
        even = x[:, :, 0::2]
        odd = x[:, :, 1::2]
        return even - odd, odd

    m = [(M, '')]
    for _ in range(N):
        x = jnp.concatenate([t for t, _ in m], axis=0)
        g0, g1 = h2_step(x)
        res = []
        for idx in range(len(m)):
            res.append((g0[idx:idx + 1], '0' + m[idx][1]))
            res.append((g1[idx:idx + 1], '1' + m[idx][1]))
        m = res
    m.sort(key=lambda t: t[1])
    value_m = jnp.stack([t[0][:, 0, :] * t[0][:, 1, :] for t in m])    # (2**N, 1, 1)
    value_m = jnp.transpose(value_m, (1, 2, 0)).reshape(1, 1, -1)      # (1, 1, 2**N)

    sub = [(value_m, '')]
    for _ in range(N):
        x = jnp.concatenate([t for t, _ in sub], axis=0)
        g0, g1 = sub_step(x)
        res = []
        for idx in range(len(sub)):
            res.append((g0[idx:idx + 1], '0' + sub[idx][1]))
            res.append((g1[idx:idx + 1], '1' + sub[idx][1]))
        sub = res
    sub.sort(key=lambda t: t[1])
    stacked = jnp.stack([t[0] for t in sub])                           # (2**N, 1, 1, 1)
    return jnp.transpose(stacked, (3, 0, 2, 1))                        # (1, 2**N, 1, 1)


def _rowwise_numpy_ref(M, n_bits):
    """Independent O(L^2) float64 reference for the per-row transform:
       out[b, t] = sum_{s & t == t} (-1)^popcount(s ^ t) * zeta(M[b,0])[s] * zeta(M[b,1])[s]
       with zeta(x)[t] = sum_{i & t == t} x[i]."""
    M = np.asarray(M, np.float64)
    L = M.shape[-1]
    idx = np.arange(L)
    sup = (idx[:, None] & idx[None, :]) == idx[None, :]       # [i, t]: i superset of t
    Z = sup.astype(np.float64)
    q0 = M[:, 0, :] @ Z
    q1 = M[:, 1, :] @ Z
    v = q0 * q1
    diff = idx[:, None] ^ idx[None, :]
    pc = np.zeros_like(diff)
    for k in range(n_bits):
        pc += (diff >> k) & 1
    U = np.where(sup, np.where(pc % 2 == 0, 1.0, -1.0), 0.0)  # [s, t]
    return v @ U                                              # (B, L)


# ----------------------------------------------------------------------------
# Self-test
# ----------------------------------------------------------------------------
if __name__ == "__main__":
    def _check_case(N, B, key):
        L = 2 ** N
        M = jax.random.uniform(key, (B, 2, L), dtype=jnp.float32)
        # mass-style rows (like the module's warmup): keeps values O(1) so the
        # f32 vs f64 comparison tolerance stays tight.
        M = M / jnp.sum(M, axis=-1, keepdims=True)

        model = CNNDSTv2Batch(N)

        # 1) faithful module forward: (1, 2**N, 1, 1) computed from batch row 0
        out = jax.block_until_ready(model(M))
        ref = jax.block_until_ready(_reference_forward(M, N))
        assert out.shape == (1, L, 1, 1), out.shape
        np.testing.assert_allclose(np.asarray(out), np.asarray(ref),
                                   rtol=5e-4, atol=5e-5)

        # 2) per-row batched variant vs an independent float64 reference
        out_all = jax.block_until_ready(model.forward_all_rows(M))
        ref_all = _rowwise_numpy_ref(M, N).reshape(B, L, 1, 1)
        assert out_all.shape == (B, L, 1, 1), out_all.shape
        np.testing.assert_allclose(np.asarray(out_all), ref_all,
                                   rtol=5e-4, atol=5e-5)

    k1, k2 = jax.random.split(jax.random.PRNGKey(0))
    _check_case(N=7, B=16, key=k1)   # L = 128 (one lane tile), 2-step batch grid
    _check_case(N=8, B=6, key=k2)    # L = 256 (aligned step-128 stage), odd batch -> padded
    print("KERNEL_OK")
</pallas_src>

<mosaic_0001>
module attributes {stable_mosaic.version = 11 : i64} {
  func.func @_cnndst_kernel(%arg0: i32, %arg1: memref<8x256xf32, #tpu.memory_space<vmem>>, %arg2: memref<8x128xf32, #tpu.memory_space<vmem>>) attributes {dimension_semantics = [#tpu.dimension_semantics<parallel>], iteration_bounds = array<i64: 1>, scalar_prefetch = 0 : i64, scratch_operands = 0 : i64, tpu.core_type = #tpu.core_type<tc>, window_params = [{transform_indices = @transform_0, window_bounds = array<i64: 8, 256>}, {transform_indices = @transform_1, window_bounds = array<i64: 8, 128>}]} {
    %c0 = arith.constant 0 : index
    %c0_0 = arith.constant 0 : index
    %0 = vector.load %arg1[%c0, %c0_0] : memref<8x256xf32, #tpu.memory_space<vmem>>, vector<8x256xf32>
    %1 = vector.extract_strided_slice %0 {offsets = [0, 0], sizes = [8, 128], strides = [1, 1]} : vector<8x256xf32> to vector<8x128xf32>
    %2 = vector.extract_strided_slice %0 {offsets = [0, 128], sizes = [8, 128], strides = [1, 1]} : vector<8x256xf32> to vector<8x128xf32>
    %3 = tpu.iota {dimensions = array<i32: 1>} : vector<1x128xi32>
    %c1_i32 = arith.constant 1 : i32
    %4 = vector.broadcast %c1_i32 : i32 to vector<1x128xi32>
    %5 = arith.andi %3, %4 : vector<1x128xi32>
    %c0_i32 = arith.constant 0 : i32
    %6 = vector.broadcast %c0_i32 : i32 to vector<1x128xi32>
    %7 = arith.cmpi eq, %5, %6 : vector<1x128xi32>
    %c2_i32 = arith.constant 2 : i32
    %8 = vector.broadcast %c2_i32 : i32 to vector<1x128xi32>
    %9 = arith.andi %3, %8 : vector<1x128xi32>
    %c0_i32_1 = arith.constant 0 : i32
    %10 = vector.broadcast %c0_i32_1 : i32 to vector<1x128xi32>
    %11 = arith.cmpi eq, %9, %10 : vector<1x128xi32>
    %c4_i32 = arith.constant 4 : i32
    %12 = vector.broadcast %c4_i32 : i32 to vector<1x128xi32>
    %13 = arith.andi %3, %12 : vector<1x128xi32>
    %c0_i32_2 = arith.constant 0 : i32
    %14 = vector.broadcast %c0_i32_2 : i32 to vector<1x128xi32>
    %15 = arith.cmpi eq, %13, %14 : vector<1x128xi32>
    %c8_i32 = arith.constant 8 : i32
    %16 = vector.broadcast %c8_i32 : i32 to vector<1x128xi32>
    %17 = arith.andi %3, %16 : vector<1x128xi32>
    %c0_i32_3 = arith.constant 0 : i32
    %18 = vector.broadcast %c0_i32_3 : i32 to vector<1x128xi32>
    %19 = arith.cmpi eq, %17, %18 : vector<1x128xi32>
    %c16_i32 = arith.constant 16 : i32
    %20 = vector.broadcast %c16_i32 : i32 to vector<1x128xi32>
    %21 = arith.andi %3, %20 : vector<1x128xi32>
    %c0_i32_4 = arith.constant 0 : i32
    %22 = vector.broadcast %c0_i32_4 : i32 to vector<1x128xi32>
    %23 = arith.cmpi eq, %21, %22 : vector<1x128xi32>
    %c32_i32 = arith.constant 32 : i32
    %24 = vector.broadcast %c32_i32 : i32 to vector<1x128xi32>
    %25 = arith.andi %3, %24 : vector<1x128xi32>
    %c0_i32_5 = arith.constant 0 : i32
    %26 = vector.broadcast %c0_i32_5 : i32 to vector<1x128xi32>
    %27 = arith.cmpi eq, %25, %26 : vector<1x128xi32>
    %c64_i32 = arith.constant 64 : i32
    %28 = vector.broadcast %c64_i32 : i32 to vector<1x128xi32>
    %29 = arith.andi %3, %28 : vector<1x128xi32>
    %c0_i32_6 = arith.constant 0 : i32
    %30 = vector.broadcast %c0_i32_6 : i32 to vector<1x128xi32>
    %31 = arith.cmpi eq, %29, %30 : vector<1x128xi32>
    %32 = vector.extract_strided_slice %1 {offsets = [0, 1], sizes = [8, 127], strides = [1, 1]} : vector<8x128xf32> to vector<8x127xf32>
    %33 = vector.extract_strided_slice %1 {offsets = [0, 0], sizes = [8, 1], strides = [1, 1]} : vector<8x128xf32> to vector<8x1xf32>
    %34 = tpu.concatenate %32, %33 in 1 : vector<8x127xf32>, vector<8x1xf32> -> vector<8x128xf32>
    %cst = arith.constant 0.000000e+00 : f32
    %35 = vector.shape_cast %7 : vector<1x128xi1> to vector<1x128xi1>
    %36 = vector.broadcast %35 : vector<1x128xi1> to vector<8x128xi1>
    %37 = vector.broadcast %cst : f32 to vector<8x128xf32>
    %38 = arith.select %36, %34, %37 : vector<8x128xi1>, vector<8x128xf32>
    %39 = arith.addf %1, %38 : vector<8x128xf32>
    %40 = vector.extract_strided_slice %2 {offsets = [0, 1], sizes = [8, 127], strides = [1, 1]} : vector<8x128xf32> to vector<8x127xf32>
    %41 = vector.extract_strided_slice %2 {offsets = [0, 0], sizes = [8, 1], strides = [1, 1]} : vector<8x128xf32> to vector<8x1xf32>
    %42 = tpu.concatenate %40, %41 in 1 : vector<8x127xf32>, vector<8x1xf32> -> vector<8x128xf32>
    %cst_7 = arith.constant 0.000000e+00 : f32
    %43 = vector.shape_cast %7 : vector<1x128xi1> to vector<1x128xi1>
    %44 = vector.broadcast %43 : vector<1x128xi1> to vector<8x128xi1>
    %45 = vector.broadcast %cst_7 : f32 to vector<8x128xf32>
    %46 = arith.select %44, %42, %45 : vector<8x128xi1>, vector<8x128xf32>
    %47 = arith.addf %2, %46 : vector<8x128xf32>
    %48 = vector.extract_strided_slice %39 {offsets = [0, 2], sizes = [8, 126], strides = [1, 1]} : vector<8x128xf32> to vector<8x126xf32>
    %49 = vector.extract_strided_slice %39 {offsets = [0, 0], sizes = [8, 2], strides = [1, 1]} : vector<8x128xf32> to vector<8x2xf32>
    %50 = tpu.concatenate %48, %49 in 1 : vector<8x126xf32>, vector<8x2xf32> -> vector<8x128xf32>
    %cst_8 = arith.constant 0.000000e+00 : f32
    %51 = vector.shape_cast %11 : vector<1x128xi1> to vector<1x128xi1>
    %52 = vector.broadcast %51 : vector<1x128xi1> to vector<8x128xi1>
    %53 = vector.broadcast %cst_8 : f32 to vector<8x128xf32>
    %54 = arith.select %52, %50, %53 : vector<8x128xi1>, vector<8x128xf32>
    %55 = arith.addf %39, %54 : vector<8x128xf32>
    %56 = vector.extract_strided_slice %47 {offsets = [0, 2], sizes = [8, 126], strides = [1, 1]} : vector<8x128xf32> to vector<8x126xf32>
    %57 = vector.extract_strided_slice %47 {offsets = [0, 0], sizes = [8, 2], strides = [1, 1]} : vector<8x128xf32> to vector<8x2xf32>
    %58 = tpu.concatenate %56, %57 in 1 : vector<8x126xf32>, vector<8x2xf32> -> vector<8x128xf32>
    %cst_9 = arith.constant 0.000000e+00 : f32
    %59 = vector.shape_cast %11 : vector<1x128xi1> to vector<1x128xi1>
    %60 = vector.broadcast %59 : vector<1x128xi1> to vector<8x128xi1>
    %61 = vector.broadcast %cst_9 : f32 to vector<8x128xf32>
    %62 = arith.select %60, %58, %61 : vector<8x128xi1>, vector<8x128xf32>
    %63 = arith.addf %47, %62 : vector<8x128xf32>
    %64 = vector.extract_strided_slice %55 {offsets = [0, 4], sizes = [8, 124], strides = [1, 1]} : vector<8x128xf32> to vector<8x124xf32>
    %65 = vector.extract_strided_slice %55 {offsets = [0, 0], sizes = [8, 4], strides = [1, 1]} : vector<8x128xf32> to vector<8x4xf32>
    %66 = tpu.concatenate %64, %65 in 1 : vector<8x124xf32>, vector<8x4xf32> -> vector<8x128xf32>
    %cst_10 = arith.constant 0.000000e+00 : f32
    %67 = vector.shape_cast %15 : vector<1x128xi1> to vector<1x128xi1>
    %68 = vector.broadcast %67 : vector<1x128xi1> to vector<8x128xi1>
    %69 = vector.broadcast %cst_10 : f32 to vector<8x128xf32>
    %70 = arith.select %68, %66, %69 : vector<8x128xi1>, vector<8x128xf32>
    %71 = arith.addf %55, %70 : vector<8x128xf32>
    %72 = vector.extract_strided_slice %63 {offsets = [0, 4], sizes = [8, 124], strides = [1, 1]} : vector<8x128xf32> to vector<8x124xf32>
    %73 = vector.extract_strided_slice %63 {offsets = [0, 0], sizes = [8, 4], strides = [1, 1]} : vector<8x128xf32> to vector<8x4xf32>
    %74 = tpu.concatenate %72, %73 in 1 : vector<8x124xf32>, vector<8x4xf32> -> vector<8x128xf32>
    %cst_11 = arith.constant 0.000000e+00 : f32
    %75 = vector.shape_cast %15 : vector<1x128xi1> to vector<1x128xi1>
    %76 = vector.broadcast %75 : vector<1x128xi1> to vector<8x128xi1>
    %77 = vector.broadcast %cst_11 : f32 to vector<8x128xf32>
    %78 = arith.select %76, %74, %77 : vector<8x128xi1>, vector<8x128xf32>
    %79 = arith.addf %63, %78 : vector<8x128xf32>
    %80 = vector.extract_strided_slice %71 {offsets = [0, 8], sizes = [8, 120], strides = [1, 1]} : vector<8x128xf32> to vector<8x120xf32>
    %81 = vector.extract_strided_slice %71 {offsets = [0, 0], sizes = [8, 8], strides = [1, 1]} : vector<8x128xf32> to vector<8x8xf32>
    %82 = tpu.concatenate %80, %81 in 1 : vector<8x120xf32>, vector<8x8xf32> -> vector<8x128xf32>
    %cst_12 = arith.constant 0.000000e+00 : f32
    %83 = vector.shape_cast %19 : vector<1x128xi1> to vector<1x128xi1>
    %84 = vector.broadcast %83 : vector<1x128xi1> to vector<8x128xi1>
    %85 = vector.broadcast %cst_12 : f32 to vector<8x128xf32>
    %86 = arith.select %84, %82, %85 : vector<8x128xi1>, vector<8x128xf32>
    %87 = arith.addf %71, %86 : vector<8x128xf32>
    %88 = vector.extract_strided_slice %79 {offsets = [0, 8], sizes = [8, 120], strides = [1, 1]} : vector<8x128xf32> to vector<8x120xf32>
    %89 = vector.extract_strided_slice %79 {offsets = [0, 0], sizes = [8, 8], strides = [1, 1]} : vector<8x128xf32> to vector<8x8xf32>
    %90 = tpu.concatenate %88, %89 in 1 : vector<8x120xf32>, vector<8x8xf32> -> vector<8x128xf32>
    %cst_13 = arith.constant 0.000000e+00 : f32
    %91 = vector.shape_cast %19 : vector<1x128xi1> to vector<1x128xi1>
    %92 = vector.broadcast %91 : vector<1x128xi1> to vector<8x128xi1>
    %93 = vector.broadcast %cst_13 : f32 to vector<8x128xf32>
    %94 = arith.select %92, %90, %93 : vector<8x128xi1>, vector<8x128xf32>
    %95 = arith.addf %79, %94 : vector<8x128xf32>
    %96 = vector.extract_strided_slice %87 {offsets = [0, 16], sizes = [8, 112], strides = [1, 1]} : vector<8x128xf32> to vector<8x112xf32>
    %97 = vector.extract_strided_slice %87 {offsets = [0, 0], sizes = [8, 16], strides = [1, 1]} : vector<8x128xf32> to vector<8x16xf32>
    %98 = tpu.concatenate %96, %97 in 1 : vector<8x112xf32>, vector<8x16xf32> -> vector<8x128xf32>
    %cst_14 = arith.constant 0.000000e+00 : f32
    %99 = vector.shape_cast %23 : vector<1x128xi1> to vector<1x128xi1>
    %100 = vector.broadcast %99 : vector<1x128xi1> to vector<8x128xi1>
    %101 = vector.broadcast %cst_14 : f32 to vector<8x128xf32>
    %102 = arith.select %100, %98, %101 : vector<8x128xi1>, vector<8x128xf32>
    %103 = arith.addf %87, %102 : vector<8x128xf32>
    %104 = vector.extract_strided_slice %95 {offsets = [0, 16], sizes = [8, 112], strides = [1, 1]} : vector<8x128xf32> to vector<8x112xf32>
    %105 = vector.extract_strided_slice %95 {offsets = [0, 0], sizes = [8, 16], strides = [1, 1]} : vector<8x128xf32> to vector<8x16xf32>
    %106 = tpu.concatenate %104, %105 in 1 : vector<8x112xf32>, vector<8x16xf32> -> vector<8x128xf32>
    %cst_15 = arith.constant 0.000000e+00 : f32
    %107 = vector.shape_cast %23 : vector<1x128xi1> to vector<1x128xi1>
    %108 = vector.broadcast %107 : vector<1x128xi1> to vector<8x128xi1>
    %109 = vector.broadcast %cst_15 : f32 to vector<8x128xf32>
    %110 = arith.select %108, %106, %109 : vector<8x128xi1>, vector<8x128xf32>
    %111 = arith.addf %95, %110 : vector<8x128xf32>
    %112 = vector.extract_strided_slice %103 {offsets = [0, 32], sizes = [8, 96], strides = [1, 1]} : vector<8x128xf32> to vector<8x96xf32>
    %113 = vector.extract_strided_slice %103 {offsets = [0, 0], sizes = [8, 32], strides = [1, 1]} : vector<8x128xf32> to vector<8x32xf32>
    %114 = tpu.concatenate %112, %113 in 1 : vector<8x96xf32>, vector<8x32xf32> -> vector<8x128xf32>
    %cst_16 = arith.constant 0.000000e+00 : f32
    %115 = vector.shape_cast %27 : vector<1x128xi1> to vector<1x128xi1>
    %116 = vector.broadcast %115 : vector<1x128xi1> to vector<8x128xi1>
    %117 = vector.broadcast %cst_16 : f32 to vector<8x128xf32>
    %118 = arith.select %116, %114, %117 : vector<8x128xi1>, vector<8x128xf32>
    %119 = arith.addf %103, %118 : vector<8x128xf32>
    %120 = vector.extract_strided_slice %111 {offsets = [0, 32], sizes = [8, 96], strides = [1, 1]} : vector<8x128xf32> to vector<8x96xf32>
    %121 = vector.extract_strided_slice %111 {offsets = [0, 0], sizes = [8, 32], strides = [1, 1]} : vector<8x128xf32> to vector<8x32xf32>
    %122 = tpu.concatenate %120, %121 in 1 : vector<8x96xf32>, vector<8x32xf32> -> vector<8x128xf32>
    %cst_17 = arith.constant 0.000000e+00 : f32
    %123 = vector.shape_cast %27 : vector<1x128xi1> to vector<1x128xi1>
    %124 = vector.broadcast %123 : vector<1x128xi1> to vector<8x128xi1>
    %125 = vector.broadcast %cst_17 : f32 to vector<8x128xf32>
    %126 = arith.select %124, %122, %125 : vector<8x128xi1>, vector<8x128xf32>
    %127 = arith.addf %111, %126 : vector<8x128xf32>
    %128 = vector.extract_strided_slice %119 {offsets = [0, 64], sizes = [8, 64], strides = [1, 1]} : vector<8x128xf32> to vector<8x64xf32>
    %129 = vector.extract_strided_slice %119 {offsets = [0, 0], sizes = [8, 64], strides = [1, 1]} : vector<8x128xf32> to vector<8x64xf32>
    %130 = tpu.concatenate %128, %129 in 1 : vector<8x64xf32>, vector<8x64xf32> -> vector<8x128xf32>
    %cst_18 = arith.constant 0.000000e+00 : f32
    %131 = vector.shape_cast %31 : vector<1x128xi1> to vector<1x128xi1>
    %132 = vector.broadcast %131 : vector<1x128xi1> to vector<8x128xi1>
    %133 = vector.broadcast %cst_18 : f32 to vector<8x128xf32>
    %134 = arith.select %132, %130, %133 : vector<8x128xi1>, vector<8x128xf32>
    %135 = arith.addf %119, %134 : vector<8x128xf32>
    %136 = vector.extract_strided_slice %127 {offsets = [0, 64], sizes = [8, 64], strides = [1, 1]} : vector<8x128xf32> to vector<8x64xf32>
    %137 = vector.extract_strided_slice %127 {offsets = [0, 0], sizes = [8, 64], strides = [1, 1]} : vector<8x128xf32> to vector<8x64xf32>
    %138 = tpu.concatenate %136, %137 in 1 : vector<8x64xf32>, vector<8x64xf32> -> vector<8x128xf32>
    %cst_19 = arith.constant 0.000000e+00 : f32
    %139 = vector.shape_cast %31 : vector<1x128xi1> to vector<1x128xi1>
    %140 = vector.broadcast %139 : vector<1x128xi1> to vector<8x128xi1>
    %141 = vector.broadcast %cst_19 : f32 to vector<8x128xf32>
    %142 = arith.select %140, %138, %141 : vector<8x128xi1>, vector<8x128xf32>
    %143 = arith.addf %127, %142 : vector<8x128xf32>
    %144 = arith.mulf %135, %143 : vector<8x128xf32>
    %145 = vector.extract_strided_slice %144 {offsets = [0, 1], sizes = [8, 127], strides = [1, 1]} : vector<8x128xf32> to vector<8x127xf32>
    %146 = vector.extract_strided_slice %144 {offsets = [0, 0], sizes = [8, 1], strides = [1, 1]} : vector<8x128xf32> to vector<8x1xf32>
    %147 = tpu.concatenate %145, %146 in 1 : vector<8x127xf32>, vector<8x1xf32> -> vector<8x128xf32>
    %cst_20 = arith.constant 0.000000e+00 : f32
    %148 = vector.shape_cast %7 : vector<1x128xi1> to vector<1x128xi1>
    %149 = vector.broadcast %148 : vector<1x128xi1> to vector<8x128xi1>
    %150 = vector.broadcast %cst_20 : f32 to vector<8x128xf32>
    %151 = arith.select %149, %147, %150 : vector<8x128xi1>, vector<8x128xf32>
    %152 = arith.subf %144, %151 : vector<8x128xf32>
    %153 = vector.extract_strided_slice %152 {offsets = [0, 2], sizes = [8, 126], strides = [1, 1]} : vector<8x128xf32> to vector<8x126xf32>
    %154 = vector.extract_strided_slice %152 {offsets = [0, 0], sizes = [8, 2], strides = [1, 1]} : vector<8x128xf32> to vector<8x2xf32>
    %155 = tpu.concatenate %153, %154 in 1 : vector<8x126xf32>, vector<8x2xf32> -> vector<8x128xf32>
    %cst_21 = arith.constant 0.000000e+00 : f32
    %156 = vector.shape_cast %11 : vector<1x128xi1> to vector<1x128xi1>
    %157 = vector.broadcast %156 : vector<1x128xi1> to vector<8x128xi1>
    %158 = vector.broadcast %cst_21 : f32 to vector<8x128xf32>
    %159 = arith.select %157, %155, %158 : vector<8x128xi1>, vector<8x128xf32>
    %160 = arith.subf %152, %159 : vector<8x128xf32>
    %161 = vector.extract_strided_slice %160 {offsets = [0, 4], sizes = [8, 124], strides = [1, 1]} : vector<8x128xf32> to vector<8x124xf32>
    %162 = vector.extract_strided_slice %160 {offsets = [0, 0], sizes = [8, 4], strides = [1, 1]} : vector<8x128xf32> to vector<8x4xf32>
    %163 = tpu.concatenate %161, %162 in 1 : vector<8x124xf32>, vector<8x4xf32> -> vector<8x128xf32>
    %cst_22 = arith.constant 0.000000e+00 : f32
    %164 = vector.shape_cast %15 : vector<1x128xi1> to vector<1x128xi1>
    %165 = vector.broadcast %164 : vector<1x128xi1> to vector<8x128xi1>
    %166 = vector.broadcast %cst_22 : f32 to vector<8x128xf32>
    %167 = arith.select %165, %163, %166 : vector<8x128xi1>, vector<8x128xf32>
    %168 = arith.subf %160, %167 : vector<8x128xf32>
    %169 = vector.extract_strided_slice %168 {offsets = [0, 8], sizes = [8, 120], strides = [1, 1]} : vector<8x128xf32> to vector<8x120xf32>
    %170 = vector.extract_strided_slice %168 {offsets = [0, 0], sizes = [8, 8], strides = [1, 1]} : vector<8x128xf32> to vector<8x8xf32>
    %171 = tpu.concatenate %169, %170 in 1 : vector<8x120xf32>, vector<8x8xf32> -> vector<8x128xf32>
    %cst_23 = arith.constant 0.000000e+00 : f32
    %172 = vector.shape_cast %19 : vector<1x128xi1> to vector<1x128xi1>
    %173 = vector.broadcast %172 : vector<1x128xi1> to vector<8x128xi1>
    %174 = vector.broadcast %cst_23 : f32 to vector<8x128xf32>
    %175 = arith.select %173, %171, %174 : vector<8x128xi1>, vector<8x128xf32>
    %176 = arith.subf %168, %175 : vector<8x128xf32>
    %177 = vector.extract_strided_slice %176 {offsets = [0, 16], sizes = [8, 112], strides = [1, 1]} : vector<8x128xf32> to vector<8x112xf32>
    %178 = vector.extract_strided_slice %176 {offsets = [0, 0], sizes = [8, 16], strides = [1, 1]} : vector<8x128xf32> to vector<8x16xf32>
    %179 = tpu.concatenate %177, %178 in 1 : vector<8x112xf32>, vector<8x16xf32> -> vector<8x128xf32>
    %cst_24 = arith.constant 0.000000e+00 : f32
    %180 = vector.shape_cast %23 : vector<1x128xi1> to vector<1x128xi1>
    %181 = vector.broadcast %180 : vector<1x128xi1> to vector<8x128xi1>
    %182 = vector.broadcast %cst_24 : f32 to vector<8x128xf32>
    %183 = arith.select %181, %179, %182 : vector<8x128xi1>, vector<8x128xf32>
    %184 = arith.subf %176, %183 : vector<8x128xf32>
    %185 = vector.extract_strided_slice %184 {offsets = [0, 32], sizes = [8, 96], strides = [1, 1]} : vector<8x128xf32> to vector<8x96xf32>
    %186 = vector.extract_strided_slice %184 {offsets = [0, 0], sizes = [8, 32], strides = [1, 1]} : vector<8x128xf32> to vector<8x32xf32>
    %187 = tpu.concatenate %185, %186 in 1 : vector<8x96xf32>, vector<8x32xf32> -> vector<8x128xf32>
    %cst_25 = arith.constant 0.000000e+00 : f32
    %188 = vector.shape_cast %27 : vector<1x128xi1> to vector<1x128xi1>
    %189 = vector.broadcast %188 : vector<1x128xi1> to vector<8x128xi1>
    %190 = vector.broadcast %cst_25 : f32 to vector<8x128xf32>
    %191 = arith.select %189, %187, %190 : vector<8x128xi1>, vector<8x128xf32>
    %192 = arith.subf %184, %191 : vector<8x128xf32>
    %193 = vector.extract_strided_slice %192 {offsets = [0, 64], sizes = [8, 64], strides = [1, 1]} : vector<8x128xf32> to vector<8x64xf32>
    %194 = vector.extract_strided_slice %192 {offsets = [0, 0], sizes = [8, 64], strides = [1, 1]} : vector<8x128xf32> to vector<8x64xf32>
    %195 = tpu.concatenate %193, %194 in 1 : vector<8x64xf32>, vector<8x64xf32> -> vector<8x128xf32>
    %cst_26 = arith.constant 0.000000e+00 : f32
    %196 = vector.shape_cast %31 : vector<1x128xi1> to vector<1x128xi1>
    %197 = vector.broadcast %196 : vector<1x128xi1> to vector<8x128xi1>
    %198 = vector.broadcast %cst_26 : f32 to vector<8x128xf32>
    %199 = arith.select %197, %195, %198 : vector<8x128xi1>, vector<8x128xf32>
    %200 = arith.subf %192, %199 : vector<8x128xf32>
    %c0_27 = arith.constant 0 : index
    %c0_28 = arith.constant 0 : index
    %201 = vector.load %arg2[%c0_27, %c0_28] : memref<8x128xf32, #tpu.memory_space<vmem>>, vector<8x128xf32>
    tpu.vector_store %arg2[%c0_27, %c0_28], %200 {strides = array<i32>} : memref<8x128xf32, #tpu.memory_space<vmem>>, vector<8x128xf32>,
    return
  }
  func.func @transform_0(%arg0: i32) -> (i32, i32) {
    %c0_i32 = arith.constant 0 : i32
    %c0_i32_0 = arith.constant 0 : i32
    return %arg0, %c0_i32 : i32, i32
  }
  func.func @transform_1(%arg0: i32) -> (i32, i32) {
    %c0_i32 = arith.constant 0 : i32
    %c0_i32_0 = arith.constant 0 : i32
    return %arg0, %c0_i32 : i32, i32
  }
}

</mosaic_0001>

<llo_original>
// kernel: _forward_rows.1
$region0: #{_forward_rows.1}
  #allocation0 [shape = 'u32[]', space=smem, size = 0x4, offset = 0x4, fixed_abs, tag = 'smem constant byte address 0x4 - core index']
  #allocation1 [shape = 'u32[144,128]{1,0:T(1,128)}', space=vmem, size = 0x12000, scoped, tag = 'internal scratch']
  %s0 = inlined_call_operand.vmem [shape: f32[8,256], index: 0, kind: input, shape index: {}]
  %s1 = inlined_call_operand.vmem [shape: f32[8,128], index: 1, kind: output, shape index: {}]
  %s2 = sld [smem:[#allocation0]]
  $region14: #{_forward_rows.1} parent=0
    _
  %s4 = ssub.s32 1, %s2
  %s5 = scalar_select 0, %s4, %s2
  // Predicated region
  $region2: #{_forward_rows.1} parent=0 // pred_check
    _
  $region3: #{_forward_rows.1} parent=0 // pred_check_branch
    %7 = sbr.rel (0) target = $region5
  $region4: #{_forward_rows.1} parent=0 // pred_region
    _
  $region5: #{_forward_rows.1} parent=0 // pred_fallthru
    _
  %v8 = vld [vmem:[%s0] sm:$0xff]
  %v9 = vld [vmem:[%s0 + $0x8] sm:$0xff]
  %v10 = vlaneseq
  %v11 = vand.u32 %v10, 127
  %v12 = vand.u32 %v11, 1
  %vm13 = vcmp.eq.s32.totalorder %v12, 0
  %v14 = vand.u32 %v11, 2
  %vm15 = vcmp.eq.s32.totalorder %v14, 0
  %v16 = vand.u32 %v11, 4
  %vm17 = vcmp.eq.s32.totalorder %v16, 0
  %v18 = vand.u32 %v11, 8
  %vm19 = vcmp.eq.s32.totalorder %v18, 0
  %v20 = vand.u32 %v11, 16
  %vm21 = vcmp.eq.s32.totalorder %v20, 0
  %v22 = vand.u32 %v11, 32
  %vm23 = vcmp.eq.s32.totalorder %v22, 0
  %v24 = vand.u32 %v11, 64
  %vm25 = vcmp.eq.s32.totalorder %v24, 0
  %27 = vrot.lane.b32.xlu0 %v8, 127
  %v28 = vpop.permute.xlu0 %27
  %v30 = vsel %vm13, 1, 0
  %vm31 = vcmp.eq.s32.totalorder %v30, 1
  %v32 = vsel %vm31, %v28, 0.0
  %v33 = vadd.f32 %v8, %v32
  %35 = vrot.lane.b32.xlu0 %v9, 127
  %v36 = vpop.permute.xlu0 %35
  %v38 = vsel %vm31, %v36, 0.0
  %v39 = vadd.f32 %v9, %v38
  %41 = vrot.lane.b32.xlu0 %v33, 126
  %v42 = vpop.permute.xlu0 %41
  %v44 = vsel %vm15, 1, 0
  %vm45 = vcmp.eq.s32.totalorder %v44, 1
  %v46 = vsel %vm45, %v42, 0.0
  %v47 = vadd.f32 %v33, %v46
  %49 = vrot.lane.b32.xlu0 %v39, 126
  %v50 = vpop.permute.xlu0 %49
  %v52 = vsel %vm45, %v50, 0.0
  %v53 = vadd.f32 %v39, %v52
  %55 = vrot.lane.b32.xlu0 %v47, 124
  %v56 = vpop.permute.xlu0 %55
  %v58 = vsel %vm17, 1, 0
  %vm59 = vcmp.eq.s32.totalorder %v58, 1
  %v60 = vsel %vm59, %v56, 0.0
  %v61 = vadd.f32 %v47, %v60
  %63 = vrot.lane.b32.xlu0 %v53, 124
  %v64 = vpop.permute.xlu0 %63
  %v66 = vsel %vm59, %v64, 0.0
  %v67 = vadd.f32 %v53, %v66
  %69 = vrot.lane.b32.xlu0 %v61, 120
  %v70 = vpop.permute.xlu0 %69
  %v72 = vsel %vm19, 1, 0
  %vm73 = vcmp.eq.s32.totalorder %v72, 1
  %v74 = vsel %vm73, %v70, 0.0
  %v75 = vadd.f32 %v61, %v74
  %77 = vrot.lane.b32.xlu0 %v67, 120
  %v78 = vpop.permute.xlu0 %77
  %v80 = vsel %vm73, %v78, 0.0
  %v81 = vadd.f32 %v67, %v80
  %83 = vrot.lane.b32.xlu0 %v75, 112
  %v84 = vpop.permute.xlu0 %83
  %v86 = vsel %vm21, 1, 0
  %vm87 = vcmp.eq.s32.totalorder %v86, 1
  %v88 = vsel %vm87, %v84, 0.0
  %v89 = vadd.f32 %v75, %v88
  %91 = vrot.lane.b32.xlu0 %v81, 112
  %v92 = vpop.permute.xlu0 %91
  %v94 = vsel %vm87, %v92, 0.0
  %v95 = vadd.f32 %v81, %v94
  %97 = vrot.lane.b32.xlu0 %v89, 96
  %v98 = vpop.permute.xlu0 %97
  %v100 = vsel %vm23, 1, 0
  %vm101 = vcmp.eq.s32.totalorder %v100, 1
  %v102 = vsel %vm101, %v98, 0.0
  %v103 = vadd.f32 %v89, %v102
  %105 = vrot.lane.b32.xlu0 %v95, 96
  %v106 = vpop.permute.xlu0 %105
  %v108 = vsel %vm101, %v106, 0.0
  %v109 = vadd.f32 %v95, %v108
  %111 = vrot.lane.b32.xlu0 %v103, 64
  %v112 = vpop.permute.xlu0 %111
  %v114 = vsel %vm25, 1, 0
  %vm115 = vcmp.eq.s32.totalorder %v114, 1
  %v116 = vsel %vm115, %v112, 0.0
  %v117 = vadd.f32 %v103, %v116
  %119 = vrot.lane.b32.xlu0 %v109, 64
  %v120 = vpop.permute.xlu0 %119
  %v122 = vsel %vm115, %v120, 0.0
  %v123 = vadd.f32 %v109, %v122
  %v124 = vmul.f32 %v117, %v123
  %126 = vrot.lane.b32.xlu0 %v124, 127
  %v127 = vpop.permute.xlu0 %126
  %v129 = vsel %vm31, %v127, 0.0
  %v130 = vsub.f32 %v124, %v129
  %132 = vrot.lane.b32.xlu0 %v130, 126
  %v133 = vpop.permute.xlu0 %132
  %v135 = vsel %vm45, %v133, 0.0
  %v136 = vsub.f32 %v130, %v135
  %138 = vrot.lane.b32.xlu0 %v136, 124
  %v139 = vpop.permute.xlu0 %138
  %v141 = vsel %vm59, %v139, 0.0
  %v142 = vsub.f32 %v136, %v141
  %144 = vrot.lane.b32.xlu0 %v142, 120
  %v145 = vpop.permute.xlu0 %144
  %v147 = vsel %vm73, %v145, 0.0
  %v148 = vsub.f32 %v142, %v147
  %150 = vrot.lane.b32.xlu0 %v148, 112
  %v151 = vpop.permute.xlu0 %150
  %v153 = vsel %vm87, %v151, 0.0
  %v154 = vsub.f32 %v148, %v153
  %156 = vrot.lane.b32.xlu0 %v154, 96
  %v157 = vpop.permute.xlu0 %156
  %v159 = vsel %vm101, %v157, 0.0
  %v160 = vsub.f32 %v154, %v159
  %162 = vrot.lane.b32.xlu0 %v160, 64
  %v163 = vpop.permute.xlu0 %162
  %v165 = vsel %vm115, %v163, 0.0
  %v166 = vsub.f32 %v160, %v165
  %167 = vst [vmem:[%s1] sm:$0xff] %v166
  // Predicated region
  $region6: #{_forward_rows.1} parent=0 // pred_check
    _
  $region7: #{_forward_rows.1} parent=0 // pred_check_branch
    %169 = sbr.rel (0) target = $region9
  $region8: #{_forward_rows.1} parent=0 // pred_region
    _
  $region9: #{_forward_rows.1} parent=0 // pred_fallthru
    _
  // Predicated region
  $region10: #{_forward_rows.1} parent=0 // pred_check
    _
  $region11: #{_forward_rows.1} parent=0 // pred_check_branch
    %171 = sbr.rel (0) target = $region13
  $region12: #{_forward_rows.1} parent=0 // pred_region
    _
  $region13: #{_forward_rows.1} parent=0 // pred_fallthru
    _

</llo_original>
